<compile_context>
chip_gen: v6e
topology: v6e:2x2x1
jax: 0.10.0
libtpu: 0.0.40
codegen_flags: <defaults>
</compile_context>

<pallas_src>
import jax
import jax.numpy as jnp
from jax.experimental import pallas as pl
from jax.experimental.pallas import tpu as pltpu


def _make_mlp_kernel(layer_dims):
    """layer_dims: tuple of (in_dim, out_dim) per Linear layer."""
    n_layers = len(layer_dims)

    def kernel(*refs):
        x_ref = refs[0]
        wb_refs = refs[1:1 + 2 * n_layers]
        o_ref = refs[1 + 2 * n_layers]

        # Per-feature activation slabs, each (tile_rows, 128) f32 -> every VPU
        # op below operates on fully dense (8,128) vregs.
        h = [x_ref[k] for k in range(layer_dims[0][0])]

        for li, (in_dim, out_dim) in enumerate(layer_dims):
            w_ref = wb_refs[2 * li]        # (out*in,) f32 in SMEM, row-major
            b_ref = wb_refs[2 * li + 1]    # (out,)    f32 in SMEM
            last = li == n_layers - 1
            new_h = []
            for j in range(out_dim):
                # acc = b[j] + sum_k w[j,k] * h[k]  (scalar-from-SMEM x vreg FMA)
                acc = h[0] * w_ref[j * in_dim] + b_ref[j]
                for k in range(1, in_dim):
                    acc = acc + h[k] * w_ref[j * in_dim + k]
                new_h.append(acc if last else jnp.maximum(acc, 0.0))
            h = new_h

        for j in range(layer_dims[-1][1]):
            o_ref[j] = h[j].astype(o_ref.dtype)

    return kernel


def dnn_forward(x, params, tile_rows=256):
    """x: (N, 3) float32.  params: list of (W, b) with W shaped (out, in)
    (PyTorch nn.Linear layout) and b shaped (out,).  Returns (N, 3) float32."""
    n, in_dim = x.shape
    out_dim = params[-1][0].shape[0]
    layer_dims = tuple((w.shape[1], w.shape[0]) for w, _ in params)

    # Batch occupies (rows, 128): rows multiple of 8 (sublanes), 128 lanes.
    tile_rows = max(8, (tile_rows // 8) * 8)
    rows = pl.cdiv(n, 128)
    rows = pl.cdiv(rows, 8) * 8
    tile_rows = min(tile_rows, rows)           # don't over-pad tiny batches
    rows = pl.cdiv(rows, tile_rows) * tile_rows
    n_pad = rows * 128

    # (N, in) -> (in, rows, 128): lane/sublane-dense, contiguous per feature.
    x_t = jnp.pad(x.T, ((0, 0), (0, n_pad - n))).reshape(in_dim, rows, 128)

    # Tiny parameters: flatten into SMEM, read as scalars inside the kernel.
    flat_wb = []
    for w, b in params:
        flat_wb.append(w.reshape(-1).astype(jnp.float32))   # w[j,k] -> j*in+k
        flat_wb.append(b.reshape(-1).astype(jnp.float32))
    smem_spec = pl.BlockSpec(memory_space=pltpu.MemorySpace.SMEM)

    y = pl.pallas_call(
        _make_mlp_kernel(layer_dims),
        out_shape=jax.ShapeDtypeStruct((out_dim, rows, 128), jnp.float32),
        grid=(rows // tile_rows,),
        in_specs=[pl.BlockSpec((in_dim, tile_rows, 128), lambda i: (0, i, 0))]
                + [smem_spec] * len(flat_wb),
        out_specs=pl.BlockSpec((out_dim, tile_rows, 128), lambda i: (0, i, 0)),
        compiler_params=pltpu.CompilerParams(
            dimension_semantics=("parallel",)),
    )(x_t, *flat_wb)

    return y.reshape(out_dim, n_pad)[:, :n].T


def init_params(key):
    """PyTorch nn.Linear-style init: W (out, in), b (out,)."""
    dims = [(3, 5), (5, 5), (5, 5), (5, 3)]   # (in, out) per layer
    params = []
    for fan_in, fan_out in dims:
        key, kw, kb = jax.random.split(key, 3)
        bound = 1.0 / jnp.sqrt(jnp.float32(fan_in))
        w = jax.random.uniform(kw, (fan_out, fan_in), jnp.float32, -bound, bound)
        b = jax.random.uniform(kb, (fan_out,), jnp.float32, -bound, bound)
        params.append((w, b))
    return params


def reference_forward(x, params):
    # Pure-VPU f32 reference (no MXU) so the tolerance check is meaningful.
    h = x
    for i, (w, b) in enumerate(params):
        h = jnp.sum(h[:, None, :] * w[None, :, :], axis=-1) + b
        if i < len(params) - 1:
            h = jnp.maximum(h, 0.0)
    return h


if __name__ == "__main__":
    key = jax.random.PRNGKey(0)
    k_x, k_p = jax.random.split(key)

    batch = 8
    x = jax.random.normal(k_x, (batch, 3), jnp.float32)
    params = init_params(k_p)

    y = jax.block_until_ready(dnn_forward(x, params))

    y_ref = reference_forward(x, params)
    assert y.shape == (batch, 3)
    assert jnp.allclose(y, y_ref, atol=1e-5, rtol=1e-5), "mismatch vs reference"

    print("KERNEL_OK")
</pallas_src>

<mosaic_0001>
module attributes {stable_mosaic.version = 11 : i64} {
  func.func @kernel(%arg0: i32, %arg1: memref<3x8x128xf32, #tpu.memory_space<vmem>>, %arg2: memref<15xf32, #tpu.memory_space<smem>>, %arg3: memref<5xf32, #tpu.memory_space<smem>>, %arg4: memref<25xf32, #tpu.memory_space<smem>>, %arg5: memref<5xf32, #tpu.memory_space<smem>>, %arg6: memref<25xf32, #tpu.memory_space<smem>>, %arg7: memref<5xf32, #tpu.memory_space<smem>>, %arg8: memref<15xf32, #tpu.memory_space<smem>>, %arg9: memref<3xf32, #tpu.memory_space<smem>>, %arg10: memref<3x8x128xf32, #tpu.memory_space<vmem>>) attributes {dimension_semantics = [#tpu.dimension_semantics<parallel>], iteration_bounds = array<i64: 1>, scalar_prefetch = 0 : i64, scratch_operands = 0 : i64, tpu.core_type = #tpu.core_type<tc>, window_params = [{transform_indices = @transform_0, window_bounds = array<i64: 3, 8, 128>}, {transform_indices = @transform_1, window_bounds = array<i64: 15>}, {transform_indices = @transform_2, window_bounds = array<i64: 5>}, {transform_indices = @transform_3, window_bounds = array<i64: 25>}, {transform_indices = @transform_4, window_bounds = array<i64: 5>}, {transform_indices = @transform_5, window_bounds = array<i64: 25>}, {transform_indices = @transform_6, window_bounds = array<i64: 5>}, {transform_indices = @transform_7, window_bounds = array<i64: 15>}, {transform_indices = @transform_8, window_bounds = array<i64: 3>}, {transform_indices = @transform_9, window_bounds = array<i64: 3, 8, 128>}]} {
    %c0 = arith.constant 0 : index
    %c0_0 = arith.constant 0 : index
    %c0_1 = arith.constant 0 : index
    %0 = vector.load %arg1[%c0, %c0_0, %c0_1] : memref<3x8x128xf32, #tpu.memory_space<vmem>>, vector<1x8x128xf32>
    %1 = vector.shape_cast %0 : vector<1x8x128xf32> to vector<8x128xf32>
    %c1 = arith.constant 1 : index
    %c0_2 = arith.constant 0 : index
    %c0_3 = arith.constant 0 : index
    %2 = vector.load %arg1[%c1, %c0_2, %c0_3] : memref<3x8x128xf32, #tpu.memory_space<vmem>>, vector<1x8x128xf32>
    %3 = vector.shape_cast %2 : vector<1x8x128xf32> to vector<8x128xf32>
    %c2 = arith.constant 2 : index
    %c0_4 = arith.constant 0 : index
    %c0_5 = arith.constant 0 : index
    %4 = vector.load %arg1[%c2, %c0_4, %c0_5] : memref<3x8x128xf32, #tpu.memory_space<vmem>>, vector<1x8x128xf32>
    %5 = vector.shape_cast %4 : vector<1x8x128xf32> to vector<8x128xf32>
    %c0_6 = arith.constant 0 : index
    %6 = memref.load %arg2[%c0_6] : memref<15xf32, #tpu.memory_space<smem>>
    %7 = vector.broadcast %6 : f32 to vector<8x128xf32>
    %8 = arith.mulf %1, %7 : vector<8x128xf32>
    %c0_7 = arith.constant 0 : index
    %9 = memref.load %arg3[%c0_7] : memref<5xf32, #tpu.memory_space<smem>>
    %10 = vector.broadcast %9 : f32 to vector<8x128xf32>
    %11 = arith.addf %8, %10 : vector<8x128xf32>
    %c1_8 = arith.constant 1 : index
    %12 = memref.load %arg2[%c1_8] : memref<15xf32, #tpu.memory_space<smem>>
    %13 = vector.broadcast %12 : f32 to vector<8x128xf32>
    %14 = arith.mulf %3, %13 : vector<8x128xf32>
    %15 = arith.addf %11, %14 : vector<8x128xf32>
    %c2_9 = arith.constant 2 : index
    %16 = memref.load %arg2[%c2_9] : memref<15xf32, #tpu.memory_space<smem>>
    %17 = vector.broadcast %16 : f32 to vector<8x128xf32>
    %18 = arith.mulf %5, %17 : vector<8x128xf32>
    %19 = arith.addf %15, %18 : vector<8x128xf32>
    %cst = arith.constant 0.000000e+00 : f32
    %20 = vector.broadcast %cst : f32 to vector<8x128xf32>
    %21 = arith.maximumf %19, %20 : vector<8x128xf32>
    %c3 = arith.constant 3 : index
    %22 = memref.load %arg2[%c3] : memref<15xf32, #tpu.memory_space<smem>>
    %23 = vector.broadcast %22 : f32 to vector<8x128xf32>
    %24 = arith.mulf %1, %23 : vector<8x128xf32>
    %c1_10 = arith.constant 1 : index
    %25 = memref.load %arg3[%c1_10] : memref<5xf32, #tpu.memory_space<smem>>
    %26 = vector.broadcast %25 : f32 to vector<8x128xf32>
    %27 = arith.addf %24, %26 : vector<8x128xf32>
    %c4 = arith.constant 4 : index
    %28 = memref.load %arg2[%c4] : memref<15xf32, #tpu.memory_space<smem>>
    %29 = vector.broadcast %28 : f32 to vector<8x128xf32>
    %30 = arith.mulf %3, %29 : vector<8x128xf32>
    %31 = arith.addf %27, %30 : vector<8x128xf32>
    %c5 = arith.constant 5 : index
    %32 = memref.load %arg2[%c5] : memref<15xf32, #tpu.memory_space<smem>>
    %33 = vector.broadcast %32 : f32 to vector<8x128xf32>
    %34 = arith.mulf %5, %33 : vector<8x128xf32>
    %35 = arith.addf %31, %34 : vector<8x128xf32>
    %cst_11 = arith.constant 0.000000e+00 : f32
    %36 = vector.broadcast %cst_11 : f32 to vector<8x128xf32>
    %37 = arith.maximumf %35, %36 : vector<8x128xf32>
    %c6 = arith.constant 6 : index
    %38 = memref.load %arg2[%c6] : memref<15xf32, #tpu.memory_space<smem>>
    %39 = vector.broadcast %38 : f32 to vector<8x128xf32>
    %40 = arith.mulf %1, %39 : vector<8x128xf32>
    %c2_12 = arith.constant 2 : index
    %41 = memref.load %arg3[%c2_12] : memref<5xf32, #tpu.memory_space<smem>>
    %42 = vector.broadcast %41 : f32 to vector<8x128xf32>
    %43 = arith.addf %40, %42 : vector<8x128xf32>
    %c7 = arith.constant 7 : index
    %44 = memref.load %arg2[%c7] : memref<15xf32, #tpu.memory_space<smem>>
    %45 = vector.broadcast %44 : f32 to vector<8x128xf32>
    %46 = arith.mulf %3, %45 : vector<8x128xf32>
    %47 = arith.addf %43, %46 : vector<8x128xf32>
    %c8 = arith.constant 8 : index
    %48 = memref.load %arg2[%c8] : memref<15xf32, #tpu.memory_space<smem>>
    %49 = vector.broadcast %48 : f32 to vector<8x128xf32>
    %50 = arith.mulf %5, %49 : vector<8x128xf32>
    %51 = arith.addf %47, %50 : vector<8x128xf32>
    %cst_13 = arith.constant 0.000000e+00 : f32
    %52 = vector.broadcast %cst_13 : f32 to vector<8x128xf32>
    %53 = arith.maximumf %51, %52 : vector<8x128xf32>
    %c9 = arith.constant 9 : index
    %54 = memref.load %arg2[%c9] : memref<15xf32, #tpu.memory_space<smem>>
    %55 = vector.broadcast %54 : f32 to vector<8x128xf32>
    %56 = arith.mulf %1, %55 : vector<8x128xf32>
    %c3_14 = arith.constant 3 : index
    %57 = memref.load %arg3[%c3_14] : memref<5xf32, #tpu.memory_space<smem>>
    %58 = vector.broadcast %57 : f32 to vector<8x128xf32>
    %59 = arith.addf %56, %58 : vector<8x128xf32>
    %c10 = arith.constant 10 : index
    %60 = memref.load %arg2[%c10] : memref<15xf32, #tpu.memory_space<smem>>
    %61 = vector.broadcast %60 : f32 to vector<8x128xf32>
    %62 = arith.mulf %3, %61 : vector<8x128xf32>
    %63 = arith.addf %59, %62 : vector<8x128xf32>
    %c11 = arith.constant 11 : index
    %64 = memref.load %arg2[%c11] : memref<15xf32, #tpu.memory_space<smem>>
    %65 = vector.broadcast %64 : f32 to vector<8x128xf32>
    %66 = arith.mulf %5, %65 : vector<8x128xf32>
    %67 = arith.addf %63, %66 : vector<8x128xf32>
    %cst_15 = arith.constant 0.000000e+00 : f32
    %68 = vector.broadcast %cst_15 : f32 to vector<8x128xf32>
    %69 = arith.maximumf %67, %68 : vector<8x128xf32>
    %c12 = arith.constant 12 : index
    %70 = memref.load %arg2[%c12] : memref<15xf32, #tpu.memory_space<smem>>
    %71 = vector.broadcast %70 : f32 to vector<8x128xf32>
    %72 = arith.mulf %1, %71 : vector<8x128xf32>
    %c4_16 = arith.constant 4 : index
    %73 = memref.load %arg3[%c4_16] : memref<5xf32, #tpu.memory_space<smem>>
    %74 = vector.broadcast %73 : f32 to vector<8x128xf32>
    %75 = arith.addf %72, %74 : vector<8x128xf32>
    %c13 = arith.constant 13 : index
    %76 = memref.load %arg2[%c13] : memref<15xf32, #tpu.memory_space<smem>>
    %77 = vector.broadcast %76 : f32 to vector<8x128xf32>
    %78 = arith.mulf %3, %77 : vector<8x128xf32>
    %79 = arith.addf %75, %78 : vector<8x128xf32>
    %c14 = arith.constant 14 : index
    %80 = memref.load %arg2[%c14] : memref<15xf32, #tpu.memory_space<smem>>
    %81 = vector.broadcast %80 : f32 to vector<8x128xf32>
    %82 = arith.mulf %5, %81 : vector<8x128xf32>
    %83 = arith.addf %79, %82 : vector<8x128xf32>
    %cst_17 = arith.constant 0.000000e+00 : f32
    %84 = vector.broadcast %cst_17 : f32 to vector<8x128xf32>
    %85 = arith.maximumf %83, %84 : vector<8x128xf32>
    %c0_18 = arith.constant 0 : index
    %86 = memref.load %arg4[%c0_18] : memref<25xf32, #tpu.memory_space<smem>>
    %87 = vector.broadcast %86 : f32 to vector<8x128xf32>
    %88 = arith.mulf %21, %87 : vector<8x128xf32>
    %c0_19 = arith.constant 0 : index
    %89 = memref.load %arg5[%c0_19] : memref<5xf32, #tpu.memory_space<smem>>
    %90 = vector.broadcast %89 : f32 to vector<8x128xf32>
    %91 = arith.addf %88, %90 : vector<8x128xf32>
    %c1_20 = arith.constant 1 : index
    %92 = memref.load %arg4[%c1_20] : memref<25xf32, #tpu.memory_space<smem>>
    %93 = vector.broadcast %92 : f32 to vector<8x128xf32>
    %94 = arith.mulf %37, %93 : vector<8x128xf32>
    %95 = arith.addf %91, %94 : vector<8x128xf32>
    %c2_21 = arith.constant 2 : index
    %96 = memref.load %arg4[%c2_21] : memref<25xf32, #tpu.memory_space<smem>>
    %97 = vector.broadcast %96 : f32 to vector<8x128xf32>
    %98 = arith.mulf %53, %97 : vector<8x128xf32>
    %99 = arith.addf %95, %98 : vector<8x128xf32>
    %c3_22 = arith.constant 3 : index
    %100 = memref.load %arg4[%c3_22] : memref<25xf32, #tpu.memory_space<smem>>
    %101 = vector.broadcast %100 : f32 to vector<8x128xf32>
    %102 = arith.mulf %69, %101 : vector<8x128xf32>
    %103 = arith.addf %99, %102 : vector<8x128xf32>
    %c4_23 = arith.constant 4 : index
    %104 = memref.load %arg4[%c4_23] : memref<25xf32, #tpu.memory_space<smem>>
    %105 = vector.broadcast %104 : f32 to vector<8x128xf32>
    %106 = arith.mulf %85, %105 : vector<8x128xf32>
    %107 = arith.addf %103, %106 : vector<8x128xf32>
    %cst_24 = arith.constant 0.000000e+00 : f32
    %108 = vector.broadcast %cst_24 : f32 to vector<8x128xf32>
    %109 = arith.maximumf %107, %108 : vector<8x128xf32>
    %c5_25 = arith.constant 5 : index
    %110 = memref.load %arg4[%c5_25] : memref<25xf32, #tpu.memory_space<smem>>
    %111 = vector.broadcast %110 : f32 to vector<8x128xf32>
    %112 = arith.mulf %21, %111 : vector<8x128xf32>
    %c1_26 = arith.constant 1 : index
    %113 = memref.load %arg5[%c1_26] : memref<5xf32, #tpu.memory_space<smem>>
    %114 = vector.broadcast %113 : f32 to vector<8x128xf32>
    %115 = arith.addf %112, %114 : vector<8x128xf32>
    %c6_27 = arith.constant 6 : index
    %116 = memref.load %arg4[%c6_27] : memref<25xf32, #tpu.memory_space<smem>>
    %117 = vector.broadcast %116 : f32 to vector<8x128xf32>
    %118 = arith.mulf %37, %117 : vector<8x128xf32>
    %119 = arith.addf %115, %118 : vector<8x128xf32>
    %c7_28 = arith.constant 7 : index
    %120 = memref.load %arg4[%c7_28] : memref<25xf32, #tpu.memory_space<smem>>
    %121 = vector.broadcast %120 : f32 to vector<8x128xf32>
    %122 = arith.mulf %53, %121 : vector<8x128xf32>
    %123 = arith.addf %119, %122 : vector<8x128xf32>
    %c8_29 = arith.constant 8 : index
    %124 = memref.load %arg4[%c8_29] : memref<25xf32, #tpu.memory_space<smem>>
    %125 = vector.broadcast %124 : f32 to vector<8x128xf32>
    %126 = arith.mulf %69, %125 : vector<8x128xf32>
    %127 = arith.addf %123, %126 : vector<8x128xf32>
    %c9_30 = arith.constant 9 : index
    %128 = memref.load %arg4[%c9_30] : memref<25xf32, #tpu.memory_space<smem>>
    %129 = vector.broadcast %128 : f32 to vector<8x128xf32>
    %130 = arith.mulf %85, %129 : vector<8x128xf32>
    %131 = arith.addf %127, %130 : vector<8x128xf32>
    %cst_31 = arith.constant 0.000000e+00 : f32
    %132 = vector.broadcast %cst_31 : f32 to vector<8x128xf32>
    %133 = arith.maximumf %131, %132 : vector<8x128xf32>
    %c10_32 = arith.constant 10 : index
    %134 = memref.load %arg4[%c10_32] : memref<25xf32, #tpu.memory_space<smem>>
    %135 = vector.broadcast %134 : f32 to vector<8x128xf32>
    %136 = arith.mulf %21, %135 : vector<8x128xf32>
    %c2_33 = arith.constant 2 : index
    %137 = memref.load %arg5[%c2_33] : memref<5xf32, #tpu.memory_space<smem>>
    %138 = vector.broadcast %137 : f32 to vector<8x128xf32>
    %139 = arith.addf %136, %138 : vector<8x128xf32>
    %c11_34 = arith.constant 11 : index
    %140 = memref.load %arg4[%c11_34] : memref<25xf32, #tpu.memory_space<smem>>
    %141 = vector.broadcast %140 : f32 to vector<8x128xf32>
    %142 = arith.mulf %37, %141 : vector<8x128xf32>
    %143 = arith.addf %139, %142 : vector<8x128xf32>
    %c12_35 = arith.constant 12 : index
    %144 = memref.load %arg4[%c12_35] : memref<25xf32, #tpu.memory_space<smem>>
    %145 = vector.broadcast %144 : f32 to vector<8x128xf32>
    %146 = arith.mulf %53, %145 : vector<8x128xf32>
    %147 = arith.addf %143, %146 : vector<8x128xf32>
    %c13_36 = arith.constant 13 : index
    %148 = memref.load %arg4[%c13_36] : memref<25xf32, #tpu.memory_space<smem>>
    %149 = vector.broadcast %148 : f32 to vector<8x128xf32>
    %150 = arith.mulf %69, %149 : vector<8x128xf32>
    %151 = arith.addf %147, %150 : vector<8x128xf32>
    %c14_37 = arith.constant 14 : index
    %152 = memref.load %arg4[%c14_37] : memref<25xf32, #tpu.memory_space<smem>>
    %153 = vector.broadcast %152 : f32 to vector<8x128xf32>
    %154 = arith.mulf %85, %153 : vector<8x128xf32>
    %155 = arith.addf %151, %154 : vector<8x128xf32>
    %cst_38 = arith.constant 0.000000e+00 : f32
    %156 = vector.broadcast %cst_38 : f32 to vector<8x128xf32>
    %157 = arith.maximumf %155, %156 : vector<8x128xf32>
    %c15 = arith.constant 15 : index
    %158 = memref.load %arg4[%c15] : memref<25xf32, #tpu.memory_space<smem>>
    %159 = vector.broadcast %158 : f32 to vector<8x128xf32>
    %160 = arith.mulf %21, %159 : vector<8x128xf32>
    %c3_39 = arith.constant 3 : index
    %161 = memref.load %arg5[%c3_39] : memref<5xf32, #tpu.memory_space<smem>>
    %162 = vector.broadcast %161 : f32 to vector<8x128xf32>
    %163 = arith.addf %160, %162 : vector<8x128xf32>
    %c16 = arith.constant 16 : index
    %164 = memref.load %arg4[%c16] : memref<25xf32, #tpu.memory_space<smem>>
    %165 = vector.broadcast %164 : f32 to vector<8x128xf32>
    %166 = arith.mulf %37, %165 : vector<8x128xf32>
    %167 = arith.addf %163, %166 : vector<8x128xf32>
    %c17 = arith.constant 17 : index
    %168 = memref.load %arg4[%c17] : memref<25xf32, #tpu.memory_space<smem>>
    %169 = vector.broadcast %168 : f32 to vector<8x128xf32>
    %170 = arith.mulf %53, %169 : vector<8x128xf32>
    %171 = arith.addf %167, %170 : vector<8x128xf32>
    %c18 = arith.constant 18 : index
    %172 = memref.load %arg4[%c18] : memref<25xf32, #tpu.memory_space<smem>>
    %173 = vector.broadcast %172 : f32 to vector<8x128xf32>
    %174 = arith.mulf %69, %173 : vector<8x128xf32>
    %175 = arith.addf %171, %174 : vector<8x128xf32>
    %c19 = arith.constant 19 : index
    %176 = memref.load %arg4[%c19] : memref<25xf32, #tpu.memory_space<smem>>
    %177 = vector.broadcast %176 : f32 to vector<8x128xf32>
    %178 = arith.mulf %85, %177 : vector<8x128xf32>
    %179 = arith.addf %175, %178 : vector<8x128xf32>
    %cst_40 = arith.constant 0.000000e+00 : f32
    %180 = vector.broadcast %cst_40 : f32 to vector<8x128xf32>
    %181 = arith.maximumf %179, %180 : vector<8x128xf32>
    %c20 = arith.constant 20 : index
    %182 = memref.load %arg4[%c20] : memref<25xf32, #tpu.memory_space<smem>>
    %183 = vector.broadcast %182 : f32 to vector<8x128xf32>
    %184 = arith.mulf %21, %183 : vector<8x128xf32>
    %c4_41 = arith.constant 4 : index
    %185 = memref.load %arg5[%c4_41] : memref<5xf32, #tpu.memory_space<smem>>
    %186 = vector.broadcast %185 : f32 to vector<8x128xf32>
    %187 = arith.addf %184, %186 : vector<8x128xf32>
    %c21 = arith.constant 21 : index
    %188 = memref.load %arg4[%c21] : memref<25xf32, #tpu.memory_space<smem>>
    %189 = vector.broadcast %188 : f32 to vector<8x128xf32>
    %190 = arith.mulf %37, %189 : vector<8x128xf32>
    %191 = arith.addf %187, %190 : vector<8x128xf32>
    %c22 = arith.constant 22 : index
    %192 = memref.load %arg4[%c22] : memref<25xf32, #tpu.memory_space<smem>>
    %193 = vector.broadcast %192 : f32 to vector<8x128xf32>
    %194 = arith.mulf %53, %193 : vector<8x128xf32>
    %195 = arith.addf %191, %194 : vector<8x128xf32>
    %c23 = arith.constant 23 : index
    %196 = memref.load %arg4[%c23] : memref<25xf32, #tpu.memory_space<smem>>
    %197 = vector.broadcast %196 : f32 to vector<8x128xf32>
    %198 = arith.mulf %69, %197 : vector<8x128xf32>
    %199 = arith.addf %195, %198 : vector<8x128xf32>
    %c24 = arith.constant 24 : index
    %200 = memref.load %arg4[%c24] : memref<25xf32, #tpu.memory_space<smem>>
    %201 = vector.broadcast %200 : f32 to vector<8x128xf32>
    %202 = arith.mulf %85, %201 : vector<8x128xf32>
    %203 = arith.addf %199, %202 : vector<8x128xf32>
    %cst_42 = arith.constant 0.000000e+00 : f32
    %204 = vector.broadcast %cst_42 : f32 to vector<8x128xf32>
    %205 = arith.maximumf %203, %204 : vector<8x128xf32>
    %c0_43 = arith.constant 0 : index
    %206 = memref.load %arg6[%c0_43] : memref<25xf32, #tpu.memory_space<smem>>
    %207 = vector.broadcast %206 : f32 to vector<8x128xf32>
    %208 = arith.mulf %109, %207 : vector<8x128xf32>
    %c0_44 = arith.constant 0 : index
    %209 = memref.load %arg7[%c0_44] : memref<5xf32, #tpu.memory_space<smem>>
    %210 = vector.broadcast %209 : f32 to vector<8x128xf32>
    %211 = arith.addf %208, %210 : vector<8x128xf32>
    %c1_45 = arith.constant 1 : index
    %212 = memref.load %arg6[%c1_45] : memref<25xf32, #tpu.memory_space<smem>>
    %213 = vector.broadcast %212 : f32 to vector<8x128xf32>
    %214 = arith.mulf %133, %213 : vector<8x128xf32>
    %215 = arith.addf %211, %214 : vector<8x128xf32>
    %c2_46 = arith.constant 2 : index
    %216 = memref.load %arg6[%c2_46] : memref<25xf32, #tpu.memory_space<smem>>
    %217 = vector.broadcast %216 : f32 to vector<8x128xf32>
    %218 = arith.mulf %157, %217 : vector<8x128xf32>
    %219 = arith.addf %215, %218 : vector<8x128xf32>
    %c3_47 = arith.constant 3 : index
    %220 = memref.load %arg6[%c3_47] : memref<25xf32, #tpu.memory_space<smem>>
    %221 = vector.broadcast %220 : f32 to vector<8x128xf32>
    %222 = arith.mulf %181, %221 : vector<8x128xf32>
    %223 = arith.addf %219, %222 : vector<8x128xf32>
    %c4_48 = arith.constant 4 : index
    %224 = memref.load %arg6[%c4_48] : memref<25xf32, #tpu.memory_space<smem>>
    %225 = vector.broadcast %224 : f32 to vector<8x128xf32>
    %226 = arith.mulf %205, %225 : vector<8x128xf32>
    %227 = arith.addf %223, %226 : vector<8x128xf32>
    %cst_49 = arith.constant 0.000000e+00 : f32
    %228 = vector.broadcast %cst_49 : f32 to vector<8x128xf32>
    %229 = arith.maximumf %227, %228 : vector<8x128xf32>
    %c5_50 = arith.constant 5 : index
    %230 = memref.load %arg6[%c5_50] : memref<25xf32, #tpu.memory_space<smem>>
    %231 = vector.broadcast %230 : f32 to vector<8x128xf32>
    %232 = arith.mulf %109, %231 : vector<8x128xf32>
    %c1_51 = arith.constant 1 : index
    %233 = memref.load %arg7[%c1_51] : memref<5xf32, #tpu.memory_space<smem>>
    %234 = vector.broadcast %233 : f32 to vector<8x128xf32>
    %235 = arith.addf %232, %234 : vector<8x128xf32>
    %c6_52 = arith.constant 6 : index
    %236 = memref.load %arg6[%c6_52] : memref<25xf32, #tpu.memory_space<smem>>
    %237 = vector.broadcast %236 : f32 to vector<8x128xf32>
    %238 = arith.mulf %133, %237 : vector<8x128xf32>
    %239 = arith.addf %235, %238 : vector<8x128xf32>
    %c7_53 = arith.constant 7 : index
    %240 = memref.load %arg6[%c7_53] : memref<25xf32, #tpu.memory_space<smem>>
    %241 = vector.broadcast %240 : f32 to vector<8x128xf32>
    %242 = arith.mulf %157, %241 : vector<8x128xf32>
    %243 = arith.addf %239, %242 : vector<8x128xf32>
    %c8_54 = arith.constant 8 : index
    %244 = memref.load %arg6[%c8_54] : memref<25xf32, #tpu.memory_space<smem>>
    %245 = vector.broadcast %244 : f32 to vector<8x128xf32>
    %246 = arith.mulf %181, %245 : vector<8x128xf32>
    %247 = arith.addf %243, %246 : vector<8x128xf32>
    %c9_55 = arith.constant 9 : index
    %248 = memref.load %arg6[%c9_55] : memref<25xf32, #tpu.memory_space<smem>>
    %249 = vector.broadcast %248 : f32 to vector<8x128xf32>
    %250 = arith.mulf %205, %249 : vector<8x128xf32>
    %251 = arith.addf %247, %250 : vector<8x128xf32>
    %cst_56 = arith.constant 0.000000e+00 : f32
    %252 = vector.broadcast %cst_56 : f32 to vector<8x128xf32>
    %253 = arith.maximumf %251, %252 : vector<8x128xf32>
    %c10_57 = arith.constant 10 : index
    %254 = memref.load %arg6[%c10_57] : memref<25xf32, #tpu.memory_space<smem>>
    %255 = vector.broadcast %254 : f32 to vector<8x128xf32>
    %256 = arith.mulf %109, %255 : vector<8x128xf32>
    %c2_58 = arith.constant 2 : index
    %257 = memref.load %arg7[%c2_58] : memref<5xf32, #tpu.memory_space<smem>>
    %258 = vector.broadcast %257 : f32 to vector<8x128xf32>
    %259 = arith.addf %256, %258 : vector<8x128xf32>
    %c11_59 = arith.constant 11 : index
    %260 = memref.load %arg6[%c11_59] : memref<25xf32, #tpu.memory_space<smem>>
    %261 = vector.broadcast %260 : f32 to vector<8x128xf32>
    %262 = arith.mulf %133, %261 : vector<8x128xf32>
    %263 = arith.addf %259, %262 : vector<8x128xf32>
    %c12_60 = arith.constant 12 : index
    %264 = memref.load %arg6[%c12_60] : memref<25xf32, #tpu.memory_space<smem>>
    %265 = vector.broadcast %264 : f32 to vector<8x128xf32>
    %266 = arith.mulf %157, %265 : vector<8x128xf32>
    %267 = arith.addf %263, %266 : vector<8x128xf32>
    %c13_61 = arith.constant 13 : index
    %268 = memref.load %arg6[%c13_61] : memref<25xf32, #tpu.memory_space<smem>>
    %269 = vector.broadcast %268 : f32 to vector<8x128xf32>
    %270 = arith.mulf %181, %269 : vector<8x128xf32>
    %271 = arith.addf %267, %270 : vector<8x128xf32>
    %c14_62 = arith.constant 14 : index
    %272 = memref.load %arg6[%c14_62] : memref<25xf32, #tpu.memory_space<smem>>
    %273 = vector.broadcast %272 : f32 to vector<8x128xf32>
    %274 = arith.mulf %205, %273 : vector<8x128xf32>
    %275 = arith.addf %271, %274 : vector<8x128xf32>
    %cst_63 = arith.constant 0.000000e+00 : f32
    %276 = vector.broadcast %cst_63 : f32 to vector<8x128xf32>
    %277 = arith.maximumf %275, %276 : vector<8x128xf32>
    %c15_64 = arith.constant 15 : index
    %278 = memref.load %arg6[%c15_64] : memref<25xf32, #tpu.memory_space<smem>>
    %279 = vector.broadcast %278 : f32 to vector<8x128xf32>
    %280 = arith.mulf %109, %279 : vector<8x128xf32>
    %c3_65 = arith.constant 3 : index
    %281 = memref.load %arg7[%c3_65] : memref<5xf32, #tpu.memory_space<smem>>
    %282 = vector.broadcast %281 : f32 to vector<8x128xf32>
    %283 = arith.addf %280, %282 : vector<8x128xf32>
    %c16_66 = arith.constant 16 : index
    %284 = memref.load %arg6[%c16_66] : memref<25xf32, #tpu.memory_space<smem>>
    %285 = vector.broadcast %284 : f32 to vector<8x128xf32>
    %286 = arith.mulf %133, %285 : vector<8x128xf32>
    %287 = arith.addf %283, %286 : vector<8x128xf32>
    %c17_67 = arith.constant 17 : index
    %288 = memref.load %arg6[%c17_67] : memref<25xf32, #tpu.memory_space<smem>>
    %289 = vector.broadcast %288 : f32 to vector<8x128xf32>
    %290 = arith.mulf %157, %289 : vector<8x128xf32>
    %291 = arith.addf %287, %290 : vector<8x128xf32>
    %c18_68 = arith.constant 18 : index
    %292 = memref.load %arg6[%c18_68] : memref<25xf32, #tpu.memory_space<smem>>
    %293 = vector.broadcast %292 : f32 to vector<8x128xf32>
    %294 = arith.mulf %181, %293 : vector<8x128xf32>
    %295 = arith.addf %291, %294 : vector<8x128xf32>
    %c19_69 = arith.constant 19 : index
    %296 = memref.load %arg6[%c19_69] : memref<25xf32, #tpu.memory_space<smem>>
    %297 = vector.broadcast %296 : f32 to vector<8x128xf32>
    %298 = arith.mulf %205, %297 : vector<8x128xf32>
    %299 = arith.addf %295, %298 : vector<8x128xf32>
    %cst_70 = arith.constant 0.000000e+00 : f32
    %300 = vector.broadcast %cst_70 : f32 to vector<8x128xf32>
    %301 = arith.maximumf %299, %300 : vector<8x128xf32>
    %c20_71 = arith.constant 20 : index
    %302 = memref.load %arg6[%c20_71] : memref<25xf32, #tpu.memory_space<smem>>
    %303 = vector.broadcast %302 : f32 to vector<8x128xf32>
    %304 = arith.mulf %109, %303 : vector<8x128xf32>
    %c4_72 = arith.constant 4 : index
    %305 = memref.load %arg7[%c4_72] : memref<5xf32, #tpu.memory_space<smem>>
    %306 = vector.broadcast %305 : f32 to vector<8x128xf32>
    %307 = arith.addf %304, %306 : vector<8x128xf32>
    %c21_73 = arith.constant 21 : index
    %308 = memref.load %arg6[%c21_73] : memref<25xf32, #tpu.memory_space<smem>>
    %309 = vector.broadcast %308 : f32 to vector<8x128xf32>
    %310 = arith.mulf %133, %309 : vector<8x128xf32>
    %311 = arith.addf %307, %310 : vector<8x128xf32>
    %c22_74 = arith.constant 22 : index
    %312 = memref.load %arg6[%c22_74] : memref<25xf32, #tpu.memory_space<smem>>
    %313 = vector.broadcast %312 : f32 to vector<8x128xf32>
    %314 = arith.mulf %157, %313 : vector<8x128xf32>
    %315 = arith.addf %311, %314 : vector<8x128xf32>
    %c23_75 = arith.constant 23 : index
    %316 = memref.load %arg6[%c23_75] : memref<25xf32, #tpu.memory_space<smem>>
    %317 = vector.broadcast %316 : f32 to vector<8x128xf32>
    %318 = arith.mulf %181, %317 : vector<8x128xf32>
    %319 = arith.addf %315, %318 : vector<8x128xf32>
    %c24_76 = arith.constant 24 : index
    %320 = memref.load %arg6[%c24_76] : memref<25xf32, #tpu.memory_space<smem>>
    %321 = vector.broadcast %320 : f32 to vector<8x128xf32>
    %322 = arith.mulf %205, %321 : vector<8x128xf32>
    %323 = arith.addf %319, %322 : vector<8x128xf32>
    %cst_77 = arith.constant 0.000000e+00 : f32
    %324 = vector.broadcast %cst_77 : f32 to vector<8x128xf32>
    %325 = arith.maximumf %323, %324 : vector<8x128xf32>
    %c0_78 = arith.constant 0 : index
    %326 = memref.load %arg8[%c0_78] : memref<15xf32, #tpu.memory_space<smem>>
    %327 = vector.broadcast %326 : f32 to vector<8x128xf32>
    %328 = arith.mulf %229, %327 : vector<8x128xf32>
    %c0_79 = arith.constant 0 : index
    %329 = memref.load %arg9[%c0_79] : memref<3xf32, #tpu.memory_space<smem>>
    %330 = vector.broadcast %329 : f32 to vector<8x128xf32>
    %331 = arith.addf %328, %330 : vector<8x128xf32>
    %c1_80 = arith.constant 1 : index
    %332 = memref.load %arg8[%c1_80] : memref<15xf32, #tpu.memory_space<smem>>
    %333 = vector.broadcast %332 : f32 to vector<8x128xf32>
    %334 = arith.mulf %253, %333 : vector<8x128xf32>
    %335 = arith.addf %331, %334 : vector<8x128xf32>
    %c2_81 = arith.constant 2 : index
    %336 = memref.load %arg8[%c2_81] : memref<15xf32, #tpu.memory_space<smem>>
    %337 = vector.broadcast %336 : f32 to vector<8x128xf32>
    %338 = arith.mulf %277, %337 : vector<8x128xf32>
    %339 = arith.addf %335, %338 : vector<8x128xf32>
    %c3_82 = arith.constant 3 : index
    %340 = memref.load %arg8[%c3_82] : memref<15xf32, #tpu.memory_space<smem>>
    %341 = vector.broadcast %340 : f32 to vector<8x128xf32>
    %342 = arith.mulf %301, %341 : vector<8x128xf32>
    %343 = arith.addf %339, %342 : vector<8x128xf32>
    %c4_83 = arith.constant 4 : index
    %344 = memref.load %arg8[%c4_83] : memref<15xf32, #tpu.memory_space<smem>>
    %345 = vector.broadcast %344 : f32 to vector<8x128xf32>
    %346 = arith.mulf %325, %345 : vector<8x128xf32>
    %347 = arith.addf %343, %346 : vector<8x128xf32>
    %c5_84 = arith.constant 5 : index
    %348 = memref.load %arg8[%c5_84] : memref<15xf32, #tpu.memory_space<smem>>
    %349 = vector.broadcast %348 : f32 to vector<8x128xf32>
    %350 = arith.mulf %229, %349 : vector<8x128xf32>
    %c1_85 = arith.constant 1 : index
    %351 = memref.load %arg9[%c1_85] : memref<3xf32, #tpu.memory_space<smem>>
    %352 = vector.broadcast %351 : f32 to vector<8x128xf32>
    %353 = arith.addf %350, %352 : vector<8x128xf32>
    %c6_86 = arith.constant 6 : index
    %354 = memref.load %arg8[%c6_86] : memref<15xf32, #tpu.memory_space<smem>>
    %355 = vector.broadcast %354 : f32 to vector<8x128xf32>
    %356 = arith.mulf %253, %355 : vector<8x128xf32>
    %357 = arith.addf %353, %356 : vector<8x128xf32>
    %c7_87 = arith.constant 7 : index
    %358 = memref.load %arg8[%c7_87] : memref<15xf32, #tpu.memory_space<smem>>
    %359 = vector.broadcast %358 : f32 to vector<8x128xf32>
    %360 = arith.mulf %277, %359 : vector<8x128xf32>
    %361 = arith.addf %357, %360 : vector<8x128xf32>
    %c8_88 = arith.constant 8 : index
    %362 = memref.load %arg8[%c8_88] : memref<15xf32, #tpu.memory_space<smem>>
    %363 = vector.broadcast %362 : f32 to vector<8x128xf32>
    %364 = arith.mulf %301, %363 : vector<8x128xf32>
    %365 = arith.addf %361, %364 : vector<8x128xf32>
    %c9_89 = arith.constant 9 : index
    %366 = memref.load %arg8[%c9_89] : memref<15xf32, #tpu.memory_space<smem>>
    %367 = vector.broadcast %366 : f32 to vector<8x128xf32>
    %368 = arith.mulf %325, %367 : vector<8x128xf32>
    %369 = arith.addf %365, %368 : vector<8x128xf32>
    %c10_90 = arith.constant 10 : index
    %370 = memref.load %arg8[%c10_90] : memref<15xf32, #tpu.memory_space<smem>>
    %371 = vector.broadcast %370 : f32 to vector<8x128xf32>
    %372 = arith.mulf %229, %371 : vector<8x128xf32>
    %c2_91 = arith.constant 2 : index
    %373 = memref.load %arg9[%c2_91] : memref<3xf32, #tpu.memory_space<smem>>
    %374 = vector.broadcast %373 : f32 to vector<8x128xf32>
    %375 = arith.addf %372, %374 : vector<8x128xf32>
    %c11_92 = arith.constant 11 : index
    %376 = memref.load %arg8[%c11_92] : memref<15xf32, #tpu.memory_space<smem>>
    %377 = vector.broadcast %376 : f32 to vector<8x128xf32>
    %378 = arith.mulf %253, %377 : vector<8x128xf32>
    %379 = arith.addf %375, %378 : vector<8x128xf32>
    %c12_93 = arith.constant 12 : index
    %380 = memref.load %arg8[%c12_93] : memref<15xf32, #tpu.memory_space<smem>>
    %381 = vector.broadcast %380 : f32 to vector<8x128xf32>
    %382 = arith.mulf %277, %381 : vector<8x128xf32>
    %383 = arith.addf %379, %382 : vector<8x128xf32>
    %c13_94 = arith.constant 13 : index
    %384 = memref.load %arg8[%c13_94] : memref<15xf32, #tpu.memory_space<smem>>
    %385 = vector.broadcast %384 : f32 to vector<8x128xf32>
    %386 = arith.mulf %301, %385 : vector<8x128xf32>
    %387 = arith.addf %383, %386 : vector<8x128xf32>
    %c14_95 = arith.constant 14 : index
    %388 = memref.load %arg8[%c14_95] : memref<15xf32, #tpu.memory_space<smem>>
    %389 = vector.broadcast %388 : f32 to vector<8x128xf32>
    %390 = arith.mulf %325, %389 : vector<8x128xf32>
    %391 = arith.addf %387, %390 : vector<8x128xf32>
    %c0_96 = arith.constant 0 : index
    %c0_97 = arith.constant 0 : index
    %c0_98 = arith.constant 0 : index
    %392 = vector.load %arg10[%c0_96, %c0_97, %c0_98] : memref<3x8x128xf32, #tpu.memory_space<vmem>>, vector<1x8x128xf32>
    %393 = vector.shape_cast %392 : vector<1x8x128xf32> to vector<8x128xf32>
    %394 = vector.shape_cast %347 : vector<8x128xf32> to vector<1x8x128xf32>
    tpu.vector_store %arg10[%c0_96, %c0_97, %c0_98], %394 {strides = array<i32>} : memref<3x8x128xf32, #tpu.memory_space<vmem>>, vector<1x8x128xf32>,
    %c1_99 = arith.constant 1 : index
    %c0_100 = arith.constant 0 : index
    %c0_101 = arith.constant 0 : index
    %395 = vector.load %arg10[%c1_99, %c0_100, %c0_101] : memref<3x8x128xf32, #tpu.memory_space<vmem>>, vector<1x8x128xf32>
    %396 = vector.shape_cast %395 : vector<1x8x128xf32> to vector<8x128xf32>
    %397 = vector.shape_cast %369 : vector<8x128xf32> to vector<1x8x128xf32>
    tpu.vector_store %arg10[%c1_99, %c0_100, %c0_101], %397 {strides = array<i32>} : memref<3x8x128xf32, #tpu.memory_space<vmem>>, vector<1x8x128xf32>,
    %c2_102 = arith.constant 2 : index
    %c0_103 = arith.constant 0 : index
    %c0_104 = arith.constant 0 : index
    %398 = vector.load %arg10[%c2_102, %c0_103, %c0_104] : memref<3x8x128xf32, #tpu.memory_space<vmem>>, vector<1x8x128xf32>
    %399 = vector.shape_cast %398 : vector<1x8x128xf32> to vector<8x128xf32>
    %400 = vector.shape_cast %391 : vector<8x128xf32> to vector<1x8x128xf32>
    tpu.vector_store %arg10[%c2_102, %c0_103, %c0_104], %400 {strides = array<i32>} : memref<3x8x128xf32, #tpu.memory_space<vmem>>, vector<1x8x128xf32>,
    return
  }
  func.func @transform_0(%arg0: i32) -> (i32, i32, i32) {
    %c0_i32 = arith.constant 0 : i32
    %c0_i32_0 = arith.constant 0 : i32
    %c0_i32_1 = arith.constant 0 : i32
    return %c0_i32, %arg0, %c0_i32_0 : i32, i32, i32
  }
  func.func @transform_1(%arg0: i32) -> i32 {
    %c0_i32 = arith.constant 0 : i32
    %c0_i32_0 = arith.constant 0 : i32
    return %c0_i32 : i32
  }
  func.func @transform_2(%arg0: i32) -> i32 {
    %c0_i32 = arith.constant 0 : i32
    %c0_i32_0 = arith.constant 0 : i32
    return %c0_i32 : i32
  }
  func.func @transform_3(%arg0: i32) -> i32 {
    %c0_i32 = arith.constant 0 : i32
    %c0_i32_0 = arith.constant 0 : i32
    return %c0_i32 : i32
  }
  func.func @transform_4(%arg0: i32) -> i32 {
    %c0_i32 = arith.constant 0 : i32
    %c0_i32_0 = arith.constant 0 : i32
    return %c0_i32 : i32
  }
  func.func @transform_5(%arg0: i32) -> i32 {
    %c0_i32 = arith.constant 0 : i32
    %c0_i32_0 = arith.constant 0 : i32
    return %c0_i32 : i32
  }
  func.func @transform_6(%arg0: i32) -> i32 {
    %c0_i32 = arith.constant 0 : i32
    %c0_i32_0 = arith.constant 0 : i32
    return %c0_i32 : i32
  }
  func.func @transform_7(%arg0: i32) -> i32 {
    %c0_i32 = arith.constant 0 : i32
    %c0_i32_0 = arith.constant 0 : i32
    return %c0_i32 : i32
  }
  func.func @transform_8(%arg0: i32) -> i32 {
    %c0_i32 = arith.constant 0 : i32
    %c0_i32_0 = arith.constant 0 : i32
    return %c0_i32 : i32
  }
  func.func @transform_9(%arg0: i32) -> (i32, i32, i32) {
    %c0_i32 = arith.constant 0 : i32
    %c0_i32_0 = arith.constant 0 : i32
    %c0_i32_1 = arith.constant 0 : i32
    return %c0_i32, %arg0, %c0_i32_0 : i32, i32, i32
  }
}

</mosaic_0001>

<llo_original>
// kernel: tpu_custom_call.1
$region0: #{tpu_custom_call.1}
  #allocation0 [shape = 'u32[]', space=smem, size = 0x4, offset = 0x4, fixed_abs, tag = 'smem constant byte address 0x4 - core index']
  #allocation1 [shape = 'u32[144,128]{1,0:T(1,128)}', space=vmem, size = 0x12000, scoped, tag = 'internal scratch']
  %s0 = inlined_call_operand.hbm [shape: f32[3,8,128], index: 0, kind: input, shape index: {}]
  %s1 = inlined_call_operand.vmem [shape: f32[15], index: 1, kind: input, shape index: {}]
  %s2 = inlined_call_operand.vmem [shape: f32[5], index: 2, kind: input, shape index: {}]
  %s3 = inlined_call_operand.vmem [shape: f32[25], index: 3, kind: input, shape index: {}]
  %s4 = inlined_call_operand.vmem [shape: f32[5], index: 4, kind: input, shape index: {}]
  %s5 = inlined_call_operand.vmem [shape: f32[25], index: 5, kind: input, shape index: {}]
  %s6 = inlined_call_operand.vmem [shape: f32[5], index: 6, kind: input, shape index: {}]
  %s7 = inlined_call_operand.vmem [shape: f32[15], index: 7, kind: input, shape index: {}]
  %s8 = inlined_call_operand.vmem [shape: f32[3], index: 8, kind: input, shape index: {}]
  %s9 = inlined_call_operand.hbm [shape: f32[3,8,128], index: 9, kind: output, shape index: {}]
  %s10 = sld [smem:[#allocation0]]
  $region82: #{tpu_custom_call.1} parent=0
    _
  %s12 = ssub.s32 1, %s10
  %s13 = scalar_select 0, %s12, %s10
  $region1: #{tpu_custom_call.1} parent=0
    #allocation2 [shape = 'u8[12288]{0}', space=vmem, size = 0x3000, scoped, tag = 'input window, operand 0, single buffered']
    #allocation3 [shape = 's32[1]{0}', space=sflag, size = 0x4, scoped, tag = 'scoped memory for tpu_custom_call.1']
    #allocation4 [shape = 's32[1]{0}', space=sflag, size = 0x4, scoped, tag = 'scoped memory for tpu_custom_call.1']
    #allocation5 [shape = 's32[1]{0}', space=sflag, size = 0x4, scoped, tag = 'scoped memory for tpu_custom_call.1']
    #allocation6 [shape = 'u8[512]{0}', space=smem, size = 0x200, scoped, tag = 'input window, operand 1, single buffered']
    #allocation7 [shape = 'u8[512]{0}', space=smem, size = 0x200, scoped, tag = 'input window, operand 2, single buffered']
    #allocation8 [shape = 's32[1]{0}', space=sflag, size = 0x4, scoped, tag = 'scoped memory for tpu_custom_call.1']
    #allocation9 [shape = 'u8[512]{0}', space=smem, size = 0x200, scoped, tag = 'input window, operand 3, single buffered']
    #allocation10 [shape = 'u8[512]{0}', space=smem, size = 0x200, scoped, tag = 'input window, operand 4, single buffered']
    #allocation11 [shape = 's32[1]{0}', space=sflag, size = 0x4, scoped, tag = 'scoped memory for tpu_custom_call.1']
    #allocation12 [shape = 'u8[512]{0}', space=smem, size = 0x200, scoped, tag = 'input window, operand 5, single buffered']
    #allocation13 [shape = 'u8[512]{0}', space=smem, size = 0x200, scoped, tag = 'input window, operand 6, single buffered']
    #allocation14 [shape = 's32[1]{0}', space=sflag, size = 0x4, scoped, tag = 'scoped memory for tpu_custom_call.1']
    #allocation15 [shape = 'u8[512]{0}', space=smem, size = 0x200, scoped, tag = 'input window, operand 7, single buffered']
    #allocation16 [shape = 'u8[512]{0}', space=smem, size = 0x200, scoped, tag = 'input window, operand 8, single buffered']
    #allocation17 [shape = 's32[1]{0}', space=sflag, size = 0x4, scoped, tag = 'scoped memory for tpu_custom_call.1']
    #allocation18 [shape = 'u8[12288]{0}', space=vmem, size = 0x3000, scoped, tag = 'output window, operand 0, single buffered']
    %14 = vsyncpa [#allocation3], 0
    %15 = vsyncpa [#allocation5], 0
    %16 = vsyncpa [#allocation8], 0
    %17 = vsyncpa [#allocation11], 0
    %18 = vsyncpa [#allocation14], 0
    %19 = vsyncpa [#allocation17], 0
    %20 = vsyncpa [#allocation4], 0
    // Predicated region
    $region2: #{tpu_custom_call.1} parent=1 // pred_check
      _
    $region3: #{tpu_custom_call.1} parent=1 // pred_check_branch
      %22 = sbr.rel (0) target = $region5
    $region4: #{tpu_custom_call.1} parent=1 // pred_region
      %s24 = ssub.s32 384, 384
      %25 = vsyncadd [#allocation3], %s24
      %s26 = sshll.u32 [#allocation2], 4
      %s27 = int_to_ptr.vmem [resolvable:$true] %s26
      %32 = dma.hbm_to_vmem [thread:$0]  %s0, 384, %s27, [#allocation3], 128, 128, 8
    $region5: #{tpu_custom_call.1} parent=1 // pred_fallthru
      _
    // Predicated region
    $region6: #{tpu_custom_call.1} parent=1 // pred_check
      _
    $region7: #{tpu_custom_call.1} parent=1 // pred_check_branch
      %34 = sbr.rel (0) target = $region9
    $region8: #{tpu_custom_call.1} parent=1 // pred_region
      %s36 = ssub.s32 16, 16
      %37 = vsyncadd [#allocation5], %s36
      %s39 = sshll.u32 %s1, 4
      %s40 = int_to_ptr.vmem [resolvable:$true] %s39
      %42 = dma.vmem_to_smem %s40, 16, [#allocation6], [#allocation5]
    $region9: #{tpu_custom_call.1} parent=1 // pred_fallthru
      _
    // Predicated region
    $region10: #{tpu_custom_call.1} parent=1 // pred_check
      _
    $region11: #{tpu_custom_call.1} parent=1 // pred_check_branch
      %44 = sbr.rel (0) target = $region13
    $region12: #{tpu_custom_call.1} parent=1 // pred_region
      %s46 = ssub.s32 16, 16
      %47 = vsyncadd [#allocation8], %s46
      %s49 = sshll.u32 %s2, 4
      %s50 = int_to_ptr.vmem [resolvable:$true] %s49
      %52 = dma.vmem_to_smem %s50, 16, [#allocation7], [#allocation8]
    $region13: #{tpu_custom_call.1} parent=1 // pred_fallthru
      _
    // Predicated region
    $region14: #{tpu_custom_call.1} parent=1 // pred_check
      _
    $region15: #{tpu_custom_call.1} parent=1 // pred_check_branch
      %54 = sbr.rel (0) target = $region17
    $region16: #{tpu_custom_call.1} parent=1 // pred_region
      %s56 = ssub.s32 16, 16
      %57 = vsyncadd [#allocation8], %s56
      %s59 = sshll.u32 %s3, 4
      %s60 = int_to_ptr.vmem [resolvable:$true] %s59
      %62 = dma.vmem_to_smem %s60, 16, [#allocation9], [#allocation8]
    $region17: #{tpu_custom_call.1} parent=1 // pred_fallthru
      _
    // Predicated region
    $region18: #{tpu_custom_call.1} parent=1 // pred_check
      _
    $region19: #{tpu_custom_call.1} parent=1 // pred_check_branch
      %64 = sbr.rel (0) target = $region21
    $region20: #{tpu_custom_call.1} parent=1 // pred_region
      %s66 = ssub.s32 16, 16
      %67 = vsyncadd [#allocation11], %s66
      %s69 = sshll.u32 %s4, 4
      %s70 = int_to_ptr.vmem [resolvable:$true] %s69
      %72 = dma.vmem_to_smem %s70, 16, [#allocation10], [#allocation11]
    $region21: #{tpu_custom_call.1} parent=1 // pred_fallthru
      _
    // Predicated region
    $region22: #{tpu_custom_call.1} parent=1 // pred_check
      _
    $region23: #{tpu_custom_call.1} parent=1 // pred_check_branch
      %74 = sbr.rel (0) target = $region25
    $region24: #{tpu_custom_call.1} parent=1 // pred_region
      %s76 = ssub.s32 16, 16
      %77 = vsyncadd [#allocation11], %s76
      %s79 = sshll.u32 %s5, 4
      %s80 = int_to_ptr.vmem [resolvable:$true] %s79
      %82 = dma.vmem_to_smem %s80, 16, [#allocation12], [#allocation11]
    $region25: #{tpu_custom_call.1} parent=1 // pred_fallthru
      _
    // Predicated region
    $region26: #{tpu_custom_call.1} parent=1 // pred_check
      _
    $region27: #{tpu_custom_call.1} parent=1 // pred_check_branch
      %84 = sbr.rel (0) target = $region29
    $region28: #{tpu_custom_call.1} parent=1 // pred_region
      %s86 = ssub.s32 16, 16
      %87 = vsyncadd [#allocation14], %s86
      %s89 = sshll.u32 %s6, 4
      %s90 = int_to_ptr.vmem [resolvable:$true] %s89
      %92 = dma.vmem_to_smem %s90, 16, [#allocation13], [#allocation14]
    $region29: #{tpu_custom_call.1} parent=1 // pred_fallthru
      _
    // Predicated region
    $region30: #{tpu_custom_call.1} parent=1 // pred_check
      _
    $region31: #{tpu_custom_call.1} parent=1 // pred_check_branch
      %94 = sbr.rel (0) target = $region33
    $region32: #{tpu_custom_call.1} parent=1 // pred_region
      %s96 = ssub.s32 16, 16
      %97 = vsyncadd [#allocation14], %s96
      %s99 = sshll.u32 %s7, 4
      %s100 = int_to_ptr.vmem [resolvable:$true] %s99
      %102 = dma.vmem_to_smem %s100, 16, [#allocation15], [#allocation14]
    $region33: #{tpu_custom_call.1} parent=1 // pred_fallthru
      _
    // Predicated region
    $region34: #{tpu_custom_call.1} parent=1 // pred_check
      _
    $region35: #{tpu_custom_call.1} parent=1 // pred_check_branch
      %104 = sbr.rel (0) target = $region37
    $region36: #{tpu_custom_call.1} parent=1 // pred_region
      %s106 = ssub.s32 16, 16
      %107 = vsyncadd [#allocation17], %s106
      %s109 = sshll.u32 %s8, 4
      %s110 = int_to_ptr.vmem [resolvable:$true] %s109
      %112 = dma.vmem_to_smem %s110, 16, [#allocation16], [#allocation17]
    $region37: #{tpu_custom_call.1} parent=1 // pred_fallthru
      _
    // Predicated region
    $region38: #{tpu_custom_call.1} parent=1 // pred_check
      _
    $region39: #{tpu_custom_call.1} parent=1 // pred_check_branch
      %114 = sbr.rel (0) target = $region41
    $region40: #{tpu_custom_call.1} parent=1 // pred_region
      %115 = dma.done [#allocation3], 384
    $region41: #{tpu_custom_call.1} parent=1 // pred_fallthru
      _
    // Predicated region
    $region42: #{tpu_custom_call.1} parent=1 // pred_check
      _
    $region43: #{tpu_custom_call.1} parent=1 // pred_check_branch
      %117 = sbr.rel (0) target = $region45
    $region44: #{tpu_custom_call.1} parent=1 // pred_region
      %118 = dma.done [#allocation5], 16
    $region45: #{tpu_custom_call.1} parent=1 // pred_fallthru
      _
    // Predicated region
    $region46: #{tpu_custom_call.1} parent=1 // pred_check
      _
    $region47: #{tpu_custom_call.1} parent=1 // pred_check_branch
      %120 = sbr.rel (0) target = $region49
    $region48: #{tpu_custom_call.1} parent=1 // pred_region
      %121 = dma.done [#allocation8], 16
    $region49: #{tpu_custom_call.1} parent=1 // pred_fallthru
      _
    // Predicated region
    $region50: #{tpu_custom_call.1} parent=1 // pred_check
      _
    $region51: #{tpu_custom_call.1} parent=1 // pred_check_branch
      %123 = sbr.rel (0) target = $region53
    $region52: #{tpu_custom_call.1} parent=1 // pred_region
      %124 = dma.done [#allocation8], 16
    $region53: #{tpu_custom_call.1} parent=1 // pred_fallthru
      _
    // Predicated region
    $region54: #{tpu_custom_call.1} parent=1 // pred_check
      _
    $region55: #{tpu_custom_call.1} parent=1 // pred_check_branch
      %126 = sbr.rel (0) target = $region57
    $region56: #{tpu_custom_call.1} parent=1 // pred_region
      %127 = dma.done [#allocation11], 16
    $region57: #{tpu_custom_call.1} parent=1 // pred_fallthru
      _
    // Predicated region
    $region58: #{tpu_custom_call.1} parent=1 // pred_check
      _
    $region59: #{tpu_custom_call.1} parent=1 // pred_check_branch
      %129 = sbr.rel (0) target = $region61
    $region60: #{tpu_custom_call.1} parent=1 // pred_region
      %130 = dma.done [#allocation11], 16
    $region61: #{tpu_custom_call.1} parent=1 // pred_fallthru
      _
    // Predicated region
    $region62: #{tpu_custom_call.1} parent=1 // pred_check
      _
    $region63: #{tpu_custom_call.1} parent=1 // pred_check_branch
      %132 = sbr.rel (0) target = $region65
    $region64: #{tpu_custom_call.1} parent=1 // pred_region
      %133 = dma.done [#allocation14], 16
    $region65: #{tpu_custom_call.1} parent=1 // pred_fallthru
      _
    // Predicated region
    $region66: #{tpu_custom_call.1} parent=1 // pred_check
      _
    $region67: #{tpu_custom_call.1} parent=1 // pred_check_branch
      %135 = sbr.rel (0) target = $region69
    $region68: #{tpu_custom_call.1} parent=1 // pred_region
      %136 = dma.done [#allocation14], 16
    $region69: #{tpu_custom_call.1} parent=1 // pred_fallthru
      _
    // Predicated region
    $region70: #{tpu_custom_call.1} parent=1 // pred_check
      _
    $region71: #{tpu_custom_call.1} parent=1 // pred_check_branch
      %138 = sbr.rel (0) target = $region73
    $region72: #{tpu_custom_call.1} parent=1 // pred_region
      %139 = dma.done [#allocation17], 16
    $region73: #{tpu_custom_call.1} parent=1 // pred_fallthru
      _
    %140 = sfence
    %v141 = vld [vmem:[#allocation2] sm:$0xff]
    %s142 = scalar_lea.vmem [#allocation2], 8
    %v143 = vld [vmem:[%s142] sm:$0xff]
    %s144 = scalar_lea.vmem [#allocation2], 16
    %v145 = vld [vmem:[%s144] sm:$0xff]
    %s146 = sld [smem:[#allocation6]]
    %v147 = vstv %s146
    %v148 = vmul.f32 %v141, %v147
    %s149 = sld [smem:[#allocation7]]
    %v150 = vstv %s149
    %v151 = vadd.f32 %v148, %v150
    %s152 = sld [smem:[#allocation6 + $0x1]]
    %v153 = vstv %s152
    %v154 = vmul.f32 %v143, %v153
    %v155 = vadd.f32 %v151, %v154
    %s156 = sld [smem:[#allocation6 + $0x2]]
    %v157 = vstv %s156
    %v158 = vmul.f32 %v145, %v157
    %v159 = vadd.f32 %v155, %v158
    %v160 = vmax.f32 %v159, 0.0
    %s161 = sld [smem:[#allocation6 + $0x3]]
    %v162 = vstv %s161
    %v163 = vmul.f32 %v141, %v162
    %s164 = sld [smem:[#allocation7 + $0x1]]
    %v165 = vstv %s164
    %v166 = vadd.f32 %v163, %v165
    %s167 = sld [smem:[#allocation6 + $0x4]]
    %v168 = vstv %s167
    %v169 = vmul.f32 %v143, %v168
    %v170 = vadd.f32 %v166, %v169
    %s171 = sld [smem:[#allocation6 + $0x5]]
    %v172 = vstv %s171
    %v173 = vmul.f32 %v145, %v172
    %v174 = vadd.f32 %v170, %v173
    %v175 = vmax.f32 %v174, 0.0
    %s176 = sld [smem:[#allocation6 + $0x6]]
    %v177 = vstv %s176
    %v178 = vmul.f32 %v141, %v177
    %s179 = sld [smem:[#allocation7 + $0x2]]
    %v180 = vstv %s179
    %v181 = vadd.f32 %v178, %v180
    %s182 = sld [smem:[#allocation6 + $0x7]]
    %v183 = vstv %s182
    %v184 = vmul.f32 %v143, %v183
    %v185 = vadd.f32 %v181, %v184
    %s186 = sld [smem:[#allocation6 + $0x8]]
    %v187 = vstv %s186
    %v188 = vmul.f32 %v145, %v187
    %v189 = vadd.f32 %v185, %v188
    %v190 = vmax.f32 %v189, 0.0
    %s191 = sld [smem:[#allocation6 + $0x9]]
    %v192 = vstv %s191
    %v193 = vmul.f32 %v141, %v192
    %s194 = sld [smem:[#allocation7 + $0x3]]
    %v195 = vstv %s194
    %v196 = vadd.f32 %v193, %v195
    %s197 = sld [smem:[#allocation6 + $0xa]]
    %v198 = vstv %s197
    %v199 = vmul.f32 %v143, %v198
    %v200 = vadd.f32 %v196, %v199
    %s201 = sld [smem:[#allocation6 + $0xb]]
    %v202 = vstv %s201
    %v203 = vmul.f32 %v145, %v202
    %v204 = vadd.f32 %v200, %v203
    %v205 = vmax.f32 %v204, 0.0
    %s206 = sld [smem:[#allocation6 + $0xc]]
    %v207 = vstv %s206
    %v208 = vmul.f32 %v141, %v207
    %s209 = sld [smem:[#allocation7 + $0x4]]
    %v210 = vstv %s209
    %v211 = vadd.f32 %v208, %v210
    %s212 = sld [smem:[#allocation6 + $0xd]]
    %v213 = vstv %s212
    %v214 = vmul.f32 %v143, %v213
    %v215 = vadd.f32 %v211, %v214
    %s216 = sld [smem:[#allocation6 + $0xe]]
    %v217 = vstv %s216
    %v218 = vmul.f32 %v145, %v217
    %v219 = vadd.f32 %v215, %v218
    %v220 = vmax.f32 %v219, 0.0
    %s221 = sld [smem:[#allocation9]]
    %v222 = vstv %s221
    %v223 = vmul.f32 %v160, %v222
    %s224 = sld [smem:[#allocation10]]
    %v225 = vstv %s224
    %v226 = vadd.f32 %v223, %v225
    %s227 = sld [smem:[#allocation9 + $0x1]]
    %v228 = vstv %s227
    %v229 = vmul.f32 %v175, %v228
    %v230 = vadd.f32 %v226, %v229
    %s231 = sld [smem:[#allocation9 + $0x2]]
    %v232 = vstv %s231
    %v233 = vmul.f32 %v190, %v232
    %v234 = vadd.f32 %v230, %v233
    %s235 = sld [smem:[#allocation9 + $0x3]]
    %v236 = vstv %s235
    %v237 = vmul.f32 %v205, %v236
    %v238 = vadd.f32 %v234, %v237
    %s239 = sld [smem:[#allocation9 + $0x4]]
    %v240 = vstv %s239
    %v241 = vmul.f32 %v220, %v240
    %v242 = vadd.f32 %v238, %v241
    %v243 = vmax.f32 %v242, 0.0
    %s244 = sld [smem:[#allocation9 + $0x5]]
    %v245 = vstv %s244
    %v246 = vmul.f32 %v160, %v245
    %s247 = sld [smem:[#allocation10 + $0x1]]
    %v248 = vstv %s247
    %v249 = vadd.f32 %v246, %v248
    %s250 = sld [smem:[#allocation9 + $0x6]]
    %v251 = vstv %s250
    %v252 = vmul.f32 %v175, %v251
    %v253 = vadd.f32 %v249, %v252
    %s254 = sld [smem:[#allocation9 + $0x7]]
    %v255 = vstv %s254
    %v256 = vmul.f32 %v190, %v255
    %v257 = vadd.f32 %v253, %v256
    %s258 = sld [smem:[#allocation9 + $0x8]]
    %v259 = vstv %s258
    %v260 = vmul.f32 %v205, %v259
    %v261 = vadd.f32 %v257, %v260
    %s262 = sld [smem:[#allocation9 + $0x9]]
    %v263 = vstv %s262
    %v264 = vmul.f32 %v220, %v263
    %v265 = vadd.f32 %v261, %v264
    %v266 = vmax.f32 %v265, 0.0
    %s267 = sld [smem:[#allocation9 + $0xa]]
    %v268 = vstv %s267
    %v269 = vmul.f32 %v160, %v268
    %s270 = sld [smem:[#allocation10 + $0x2]]
    %v271 = vstv %s270
    %v272 = vadd.f32 %v269, %v271
    %s273 = sld [smem:[#allocation9 + $0xb]]
    %v274 = vstv %s273
    %v275 = vmul.f32 %v175, %v274
    %v276 = vadd.f32 %v272, %v275
    %s277 = sld [smem:[#allocation9 + $0xc]]
    %v278 = vstv %s277
    %v279 = vmul.f32 %v190, %v278
    %v280 = vadd.f32 %v276, %v279
    %s281 = sld [smem:[#allocation9 + $0xd]]
    %v282 = vstv %s281
    %v283 = vmul.f32 %v205, %v282
    %v284 = vadd.f32 %v280, %v283
    %s285 = sld [smem:[#allocation9 + $0xe]]
    %v286 = vstv %s285
    %v287 = vmul.f32 %v220, %v286
    %v288 = vadd.f32 %v284, %v287
    %v289 = vmax.f32 %v288, 0.0
    %s290 = sld [smem:[#allocation9 + $0xf]]
    %v291 = vstv %s290
    %v292 = vmul.f32 %v160, %v291
    %s293 = sld [smem:[#allocation10 + $0x3]]
    %v294 = vstv %s293
    %v295 = vadd.f32 %v292, %v294
    %s296 = sld [smem:[#allocation9 + $0x10]]
    %v297 = vstv %s296
    %v298 = vmul.f32 %v175, %v297
    %v299 = vadd.f32 %v295, %v298
    %s300 = sld [smem:[#allocation9 + $0x11]]
    %v301 = vstv %s300
    %v302 = vmul.f32 %v190, %v301
    %v303 = vadd.f32 %v299, %v302
    %s304 = sld [smem:[#allocation9 + $0x12]]
    %v305 = vstv %s304
    %v306 = vmul.f32 %v205, %v305
    %v307 = vadd.f32 %v303, %v306
    %s308 = sld [smem:[#allocation9 + $0x13]]
    %v309 = vstv %s308
    %v310 = vmul.f32 %v220, %v309
    %v311 = vadd.f32 %v307, %v310
    %v312 = vmax.f32 %v311, 0.0
    %s313 = sld [smem:[#allocation9 + $0x14]]
    %v314 = vstv %s313
    %v315 = vmul.f32 %v160, %v314
    %s316 = sld [smem:[#allocation10 + $0x4]]
    %v317 = vstv %s316
    %v318 = vadd.f32 %v315, %v317
    %s319 = sld [smem:[#allocation9 + $0x15]]
    %v320 = vstv %s319
    %v321 = vmul.f32 %v175, %v320
    %v322 = vadd.f32 %v318, %v321
    %s323 = sld [smem:[#allocation9 + $0x16]]
    %v324 = vstv %s323
    %v325 = vmul.f32 %v190, %v324
    %v326 = vadd.f32 %v322, %v325
    %s327 = sld [smem:[#allocation9 + $0x17]]
    %v328 = vstv %s327
    %v329 = vmul.f32 %v205, %v328
    %v330 = vadd.f32 %v326, %v329
    %s331 = sld [smem:[#allocation9 + $0x18]]
    %v332 = vstv %s331
    %v333 = vmul.f32 %v220, %v332
    %v334 = vadd.f32 %v330, %v333
    %v335 = vmax.f32 %v334, 0.0
    %s336 = sld [smem:[#allocation12]]
    %v337 = vstv %s336
    %v338 = vmul.f32 %v243, %v337
    %s339 = sld [smem:[#allocation13]]
    %v340 = vstv %s339
    %v341 = vadd.f32 %v338, %v340
    %s342 = sld [smem:[#allocation12 + $0x1]]
    %v343 = vstv %s342
    %v344 = vmul.f32 %v266, %v343
    %v345 = vadd.f32 %v341, %v344
    %s346 = sld [smem:[#allocation12 + $0x2]]
    %v347 = vstv %s346
    %v348 = vmul.f32 %v289, %v347
    %v349 = vadd.f32 %v345, %v348
    %s350 = sld [smem:[#allocation12 + $0x3]]
    %v351 = vstv %s350
    %v352 = vmul.f32 %v312, %v351
    %v353 = vadd.f32 %v349, %v352
    %s354 = sld [smem:[#allocation12 + $0x4]]
    %v355 = vstv %s354
    %v356 = vmul.f32 %v335, %v355
    %v357 = vadd.f32 %v353, %v356
    %v358 = vmax.f32 %v357, 0.0
    %s359 = sld [smem:[#allocation12 + $0x5]]
    %v360 = vstv %s359
    %v361 = vmul.f32 %v243, %v360
    %s362 = sld [smem:[#allocation13 + $0x1]]
    %v363 = vstv %s362
    %v364 = vadd.f32 %v361, %v363
    %s365 = sld [smem:[#allocation12 + $0x6]]
    %v366 = vstv %s365
    %v367 = vmul.f32 %v266, %v366
    %v368 = vadd.f32 %v364, %v367
    %s369 = sld [smem:[#allocation12 + $0x7]]
    %v370 = vstv %s369
    %v371 = vmul.f32 %v289, %v370
    %v372 = vadd.f32 %v368, %v371
    %s373 = sld [smem:[#allocation12 + $0x8]]
    %v374 = vstv %s373
    %v375 = vmul.f32 %v312, %v374
    %v376 = vadd.f32 %v372, %v375
    %s377 = sld [smem:[#allocation12 + $0x9]]
    %v378 = vstv %s377
    %v379 = vmul.f32 %v335, %v378
    %v380 = vadd.f32 %v376, %v379
    %v381 = vmax.f32 %v380, 0.0
    %s382 = sld [smem:[#allocation12 + $0xa]]
    %v383 = vstv %s382
    %v384 = vmul.f32 %v243, %v383
    %s385 = sld [smem:[#allocation13 + $0x2]]
    %v386 = vstv %s385
    %v387 = vadd.f32 %v384, %v386
    %s388 = sld [smem:[#allocation12 + $0xb]]
    %v389 = vstv %s388
    %v390 = vmul.f32 %v266, %v389
    %v391 = vadd.f32 %v387, %v390
    %s392 = sld [smem:[#allocation12 + $0xc]]
    %v393 = vstv %s392
    %v394 = vmul.f32 %v289, %v393
    %v395 = vadd.f32 %v391, %v394
    %s396 = sld [smem:[#allocation12 + $0xd]]
    %v397 = vstv %s396
    %v398 = vmul.f32 %v312, %v397
    %v399 = vadd.f32 %v395, %v398
    %s400 = sld [smem:[#allocation12 + $0xe]]
    %v401 = vstv %s400
    %v402 = vmul.f32 %v335, %v401
    %v403 = vadd.f32 %v399, %v402
    %v404 = vmax.f32 %v403, 0.0
    %s405 = sld [smem:[#allocation12 + $0xf]]
    %v406 = vstv %s405
    %v407 = vmul.f32 %v243, %v406
    %s408 = sld [smem:[#allocation13 + $0x3]]
    %v409 = vstv %s408
    %v410 = vadd.f32 %v407, %v409
    %s411 = sld [smem:[#allocation12 + $0x10]]
    %v412 = vstv %s411
    %v413 = vmul.f32 %v266, %v412
    %v414 = vadd.f32 %v410, %v413
    %s415 = sld [smem:[#allocation12 + $0x11]]
    %v416 = vstv %s415
    %v417 = vmul.f32 %v289, %v416
    %v418 = vadd.f32 %v414, %v417
    %s419 = sld [smem:[#allocation12 + $0x12]]
    %v420 = vstv %s419
    %v421 = vmul.f32 %v312, %v420
    %v422 = vadd.f32 %v418, %v421
    %s423 = sld [smem:[#allocation12 + $0x13]]
    %v424 = vstv %s423
    %v425 = vmul.f32 %v335, %v424
    %v426 = vadd.f32 %v422, %v425
    %v427 = vmax.f32 %v426, 0.0
    %s428 = sld [smem:[#allocation12 + $0x14]]
    %v429 = vstv %s428
    %v430 = vmul.f32 %v243, %v429
    %s431 = sld [smem:[#allocation13 + $0x4]]
    %v432 = vstv %s431
    %v433 = vadd.f32 %v430, %v432
    %s434 = sld [smem:[#allocation12 + $0x15]]
    %v435 = vstv %s434
    %v436 = vmul.f32 %v266, %v435
    %v437 = vadd.f32 %v433, %v436
    %s438 = sld [smem:[#allocation12 + $0x16]]
    %v439 = vstv %s438
    %v440 = vmul.f32 %v289, %v439
    %v441 = vadd.f32 %v437, %v440
    %s442 = sld [smem:[#allocation12 + $0x17]]
    %v443 = vstv %s442
    %v444 = vmul.f32 %v312, %v443
    %v445 = vadd.f32 %v441, %v444
    %s446 = sld [smem:[#allocation12 + $0x18]]
    %v447 = vstv %s446
    %v448 = vmul.f32 %v335, %v447
    %v449 = vadd.f32 %v445, %v448
    %v450 = vmax.f32 %v449, 0.0
    %s451 = sld [smem:[#allocation15]]
    %v452 = vstv %s451
    %v453 = vmul.f32 %v358, %v452
    %s454 = sld [smem:[#allocation16]]
    %v455 = vstv %s454
    %v456 = vadd.f32 %v453, %v455
    %s457 = sld [smem:[#allocation15 + $0x1]]
    %v458 = vstv %s457
    %v459 = vmul.f32 %v381, %v458
    %v460 = vadd.f32 %v456, %v459
    %s461 = sld [smem:[#allocation15 + $0x2]]
    %v462 = vstv %s461
    %v463 = vmul.f32 %v404, %v462
    %v464 = vadd.f32 %v460, %v463
    %s465 = sld [smem:[#allocation15 + $0x3]]
    %v466 = vstv %s465
    %v467 = vmul.f32 %v427, %v466
    %v468 = vadd.f32 %v464, %v467
    %s469 = sld [smem:[#allocation15 + $0x4]]
    %v470 = vstv %s469
    %v471 = vmul.f32 %v450, %v470
    %v472 = vadd.f32 %v468, %v471
    %s473 = sld [smem:[#allocation15 + $0x5]]
    %v474 = vstv %s473
    %v475 = vmul.f32 %v358, %v474
    %s476 = sld [smem:[#allocation16 + $0x1]]
    %v477 = vstv %s476
    %v478 = vadd.f32 %v475, %v477
    %s479 = sld [smem:[#allocation15 + $0x6]]
    %v480 = vstv %s479
    %v481 = vmul.f32 %v381, %v480
    %v482 = vadd.f32 %v478, %v481
    %s483 = sld [smem:[#allocation15 + $0x7]]
    %v484 = vstv %s483
    %v485 = vmul.f32 %v404, %v484
    %v486 = vadd.f32 %v482, %v485
    %s487 = sld [smem:[#allocation15 + $0x8]]
    %v488 = vstv %s487
    %v489 = vmul.f32 %v427, %v488
    %v490 = vadd.f32 %v486, %v489
    %s491 = sld [smem:[#allocation15 + $0x9]]
    %v492 = vstv %s491
    %v493 = vmul.f32 %v450, %v492
    %v494 = vadd.f32 %v490, %v493
    %s495 = sld [smem:[#allocation15 + $0xa]]
    %v496 = vstv %s495
    %v497 = vmul.f32 %v358, %v496
    %s498 = sld [smem:[#allocation16 + $0x2]]
    %v499 = vstv %s498
    %v500 = vadd.f32 %v497, %v499
    %s501 = sld [smem:[#allocation15 + $0xb]]
    %v502 = vstv %s501
    %v503 = vmul.f32 %v381, %v502
    %v504 = vadd.f32 %v500, %v503
    %s505 = sld [smem:[#allocation15 + $0xc]]
    %v506 = vstv %s505
    %v507 = vmul.f32 %v404, %v506
    %v508 = vadd.f32 %v504, %v507
    %s509 = sld [smem:[#allocation15 + $0xd]]
    %v510 = vstv %s509
    %v511 = vmul.f32 %v427, %v510
    %v512 = vadd.f32 %v508, %v511
    %s513 = sld [smem:[#allocation15 + $0xe]]
    %v514 = vstv %s513
    %v515 = vmul.f32 %v450, %v514
    %v516 = vadd.f32 %v512, %v515
    %517 = vst [vmem:[#allocation18] sm:$0xff] %v472
    %s518 = scalar_lea.vmem [#allocation18], 8
    %519 = vst [vmem:[%s518] sm:$0xff] %v494
    %s520 = scalar_lea.vmem [#allocation18], 16
    %521 = vst [vmem:[%s520] sm:$0xff] %v516
    // Predicated region
    $region74: #{tpu_custom_call.1} parent=1 // pred_check
      _
    $region75: #{tpu_custom_call.1} parent=1 // pred_check_branch
      %523 = sbr.rel (0) target = $region77
    $region76: #{tpu_custom_call.1} parent=1 // pred_region
      %s525 = ssub.s32 384, 384
      %526 = vsyncadd [#allocation4], %s525
      %s527 = sshll.u32 [#allocation18], 4
      %s528 = int_to_ptr.vmem [resolvable:$true] %s527
      %533 = dma.vmem_to_hbm [thread:$0]  %s528, 384, %s9, [#allocation4], 128, 128, 8
    $region77: #{tpu_custom_call.1} parent=1 // pred_fallthru
      _
    // Predicated region
    $region78: #{tpu_custom_call.1} parent=1 // pred_check
      _
    $region79: #{tpu_custom_call.1} parent=1 // pred_check_branch
      %535 = sbr.rel (0) target = $region81
    $region80: #{tpu_custom_call.1} parent=1 // pred_region
      %536 = dma.done [#allocation4], 384
    $region81: #{tpu_custom_call.1} parent=1 // pred_fallthru
      _
    %537 = vsyncpa [#allocation3], 1
    %538 = vsyncpa [#allocation4], 1
    %539 = vsyncpa [#allocation5], 1
    %540 = vsyncpa [#allocation8], 1
    %541 = vsyncpa [#allocation11], 1
    %542 = vsyncpa [#allocation14], 1
    %543 = vsyncpa [#allocation17], 1

</llo_original>
